<compile_context>
chip_gen: v7x
topology: tpu7x:2x2x1
jax: 0.10.0
libtpu: 0.0.40
codegen_flags: <defaults>
</compile_context>

<pallas_src>
import functools

import jax
import jax.numpy as jnp
from jax.experimental import pallas as pl
from jax.experimental.pallas import tpu as pltpu

FEAT = 128          # padded hidden / output lane width
NUM_CLASSES = 10    # real output classes
IN_FEATURES = 100   # real input features (not padded)
NEG_INF = -1e30     # poison value for padded logit columns


def _round_up(x, m):
    return ((x + m - 1) // m) * m


def mlp_kernel(x_ref, w1_ref, b1_ref, w2_ref, b2_ref, w3_ref, b3_ref, o_ref):
    # x tile: (TB, 100) f32 -> bf16 for the MXU; accumulate in f32.
    x = x_ref[...].astype(jnp.bfloat16)

    # fc1 + ReLU
    h1 = jnp.dot(x, w1_ref[...], preferred_element_type=jnp.float32) + b1_ref[...]
    h1 = jnp.maximum(h1, 0.0).astype(jnp.bfloat16)

    # fc2 + ReLU
    h2 = jnp.dot(h1, w2_ref[...], preferred_element_type=jnp.float32) + b2_ref[...]
    h2 = jnp.maximum(h2, 0.0).astype(jnp.bfloat16)

    # fc3 (padded columns carry a -1e30 bias -> exp underflows to 0 below)
    logits = jnp.dot(h2, w3_ref[...], preferred_element_type=jnp.float32) + b3_ref[...]

    # Numerically stable log_softmax over the full 128 lanes, in f32.
    m = jnp.max(logits, axis=-1, keepdims=True)
    shifted = logits - m
    lse = jnp.log(jnp.sum(jnp.exp(shifted), axis=-1, keepdims=True))
    o_ref[...] = (shifted - lse).astype(o_ref.dtype)


@functools.partial(jax.jit, static_argnames=("max_tile",))
def net_arch1_forward(x, packed, max_tile=512):
    """x: (B, 100) float32. packed: dict of bf16 weights / f32 biases."""
    B, f_in = x.shape

    # Batch tile: multiple of 8 sublanes, capped at max_tile, and sized so the
    # grid has >=2 steps whenever B >= 16 (v7x megacore sharding + pipelining).
    TB = min(max_tile, max(8, _round_up(pl.cdiv(B, 2), 8)))
    grid = (pl.cdiv(B, TB),)   # partial last tile allowed; garbage rows sliced off

    x_spec  = pl.BlockSpec((TB, f_in), lambda i: (i, 0))      # streamed, no padding
    w1_spec = pl.BlockSpec((f_in, FEAT), lambda i: (0, 0))    # VMEM-resident
    w_spec  = pl.BlockSpec((FEAT, FEAT), lambda i: (0, 0))    # VMEM-resident
    b_spec  = pl.BlockSpec((1, FEAT), lambda i: (0, 0))       # VMEM-resident
    o_spec  = pl.BlockSpec((TB, FEAT), lambda i: (i, 0))      # lane-dense bf16 output

    out = pl.pallas_call(
        mlp_kernel,
        out_shape=jax.ShapeDtypeStruct((B, FEAT), jnp.bfloat16),
        grid=grid,
        in_specs=[x_spec, w1_spec, b_spec, w_spec, b_spec, w_spec, b_spec],
        out_specs=o_spec,
        compiler_params=pltpu.CompilerParams(
            dimension_semantics=("parallel",),      # shards over v7x's 2 TCs
            vmem_limit_bytes=24 * 1024 * 1024,      # ~6 MiB working set + headroom
        ),
    )(
        x,
        packed["w1"], packed["b1"],
        packed["w2"], packed["b2"],
        packed["w3"], packed["b3"],
    )
    # Slice off the padded classes (and any partial-tile garbage rows).
    return out[:B, :NUM_CLASSES].astype(jnp.float32)


def init_params(key):
    """PyTorch nn.Linear-style init (U(-1/sqrt(fan_in), +1/sqrt(fan_in)))."""
    def linear(k, fan_in, fan_out):
        kw, kb = jax.random.split(k)
        bound = 1.0 / jnp.sqrt(fan_in)
        # Stored already transposed: (in, out), so the kernel computes x @ W + b.
        w = jax.random.uniform(kw, (fan_in, fan_out), jnp.float32, -bound, bound)
        b = jax.random.uniform(kb, (1, fan_out), jnp.float32, -bound, bound)
        return w, b

    k1, k2, k3 = jax.random.split(key, 3)
    w1, b1 = linear(k1, IN_FEATURES, 100)
    w2, b2 = linear(k2, 100, 100)
    w3, b3 = linear(k3, 100, NUM_CLASSES)
    return {"w1": w1, "b1": b1, "w2": w2, "b2": b2, "w3": w3, "b3": b3}


def pack_params(params):
    """Zero-pad hidden/output dims to 128; weights -> bf16, biases stay f32.

    w1 keeps its real K=100 rows (x is streamed unpadded); w2/w3 rows are
    padded to 128 to match the 128-wide hidden activations.  The padded logit
    bias columns are poisoned with -1e30 so the 128-lane log_softmax is exact
    for the 10 real classes.
    """
    def pad_w(w, rows):
        fi, fo = w.shape
        return (jnp.zeros((rows, FEAT), jnp.float32)
                .at[:fi, :fo].set(w).astype(jnp.bfloat16))

    def pad_b(b, fill=0.0):
        fo = b.shape[-1]
        return jnp.full((1, FEAT), fill, jnp.float32).at[:, :fo].set(b.reshape(1, fo))

    return {
        "w1": pad_w(params["w1"], IN_FEATURES), "b1": pad_b(params["b1"]),
        "w2": pad_w(params["w2"], FEAT),        "b2": pad_b(params["b2"]),
        "w3": pad_w(params["w3"], FEAT),        "b3": pad_b(params["b3"], fill=NEG_INF),
    }


def reference_forward(x, params):
    """Pure-f32 JAX reference matching the PyTorch module."""
    h1 = jnp.maximum(x @ params["w1"] + params["b1"], 0.0)
    h2 = jnp.maximum(h1 @ params["w2"] + params["b2"], 0.0)
    logits = h2 @ params["w3"] + params["b3"]
    return jax.nn.log_softmax(logits, axis=1)


if __name__ == "__main__":
    key = jax.random.PRNGKey(0)
    kx, kp = jax.random.split(key)

    B = 8
    x = jax.random.normal(kx, (B, IN_FEATURES), jnp.float32)
    params = init_params(kp)
    packed = pack_params(params)

    out = net_arch1_forward(x, packed)
    out = jax.block_until_ready(out)

    ref = reference_forward(x, params)
    assert out.shape == (B, NUM_CLASSES)
    # bf16 MXU operands + bf16 output stream -> loosened tolerance vs f32 ref.
    assert jnp.allclose(out, ref, atol=3e-2, rtol=0.0), float(jnp.max(jnp.abs(out - ref)))

    print("KERNEL_OK")
</pallas_src>

<mosaic_0001>
module attributes {stable_mosaic.version = 11 : i64} {
  func.func @mlp_kernel(%arg0: i32, %arg1: memref<8x100xf32, #tpu.memory_space<vmem>>, %arg2: memref<100x128xbf16, #tpu.memory_space<vmem>>, %arg3: memref<1x128xf32, #tpu.memory_space<vmem>>, %arg4: memref<128x128xbf16, #tpu.memory_space<vmem>>, %arg5: memref<1x128xf32, #tpu.memory_space<vmem>>, %arg6: memref<128x128xbf16, #tpu.memory_space<vmem>>, %arg7: memref<1x128xf32, #tpu.memory_space<vmem>>, %arg8: memref<8x128xbf16, #tpu.memory_space<vmem>>) attributes {dimension_semantics = [#tpu.dimension_semantics<parallel>], iteration_bounds = array<i64: 1>, scalar_prefetch = 0 : i64, scratch_operands = 0 : i64, tpu.core_type = #tpu.core_type<tc>, window_params = [{transform_indices = @transform_0, window_bounds = array<i64: 8, 100>}, {pipeline_mode = #tpu.pipeline_mode<synchronous>, transform_indices = @transform_1, window_bounds = array<i64: 100, 128>}, {pipeline_mode = #tpu.pipeline_mode<synchronous>, transform_indices = @transform_2, window_bounds = array<i64: 1, 128>}, {pipeline_mode = #tpu.pipeline_mode<synchronous>, transform_indices = @transform_3, window_bounds = array<i64: 128, 128>}, {pipeline_mode = #tpu.pipeline_mode<synchronous>, transform_indices = @transform_4, window_bounds = array<i64: 1, 128>}, {pipeline_mode = #tpu.pipeline_mode<synchronous>, transform_indices = @transform_5, window_bounds = array<i64: 128, 128>}, {pipeline_mode = #tpu.pipeline_mode<synchronous>, transform_indices = @transform_6, window_bounds = array<i64: 1, 128>}, {transform_indices = @transform_7, window_bounds = array<i64: 8, 128>}]} {
    %c0 = arith.constant 0 : index
    %c0_0 = arith.constant 0 : index
    %0 = vector.load %arg1[%c0, %c0_0] : memref<8x100xf32, #tpu.memory_space<vmem>>, vector<8x100xf32>
    %1 = arith.truncf %0 : vector<8x100xf32> to vector<8x100xbf16>
    %c0_1 = arith.constant 0 : index
    %c0_2 = arith.constant 0 : index
    %2 = vector.load %arg2[%c0_1, %c0_2] : memref<100x128xbf16, #tpu.memory_space<vmem>>, vector<100x128xbf16>
    %cst = arith.constant dense<0.000000e+00> : vector<8x128xf32>
    %3 = tpu.matmul %1, %2, %cst {dimension_numbers = #tpu.dot_dimension_numbers<[1], [0], [0], [1], [0, 0, 1, 1], [], []>} : vector<8x100xbf16>, vector<100x128xbf16>, vector<8x128xf32> -> vector<8x128xf32>
    %c0_3 = arith.constant 0 : index
    %c0_4 = arith.constant 0 : index
    %4 = vector.load %arg3[%c0_3, %c0_4] : memref<1x128xf32, #tpu.memory_space<vmem>>, vector<1x128xf32>
    %5 = vector.broadcast %4 : vector<1x128xf32> to vector<8x128xf32>
    %6 = arith.addf %3, %5 : vector<8x128xf32>
    %cst_5 = arith.constant 0.000000e+00 : f32
    %7 = vector.broadcast %cst_5 : f32 to vector<8x128xf32>
    %8 = arith.maximumf %6, %7 : vector<8x128xf32>
    %9 = arith.truncf %8 : vector<8x128xf32> to vector<8x128xbf16>
    %c0_6 = arith.constant 0 : index
    %c0_7 = arith.constant 0 : index
    %10 = vector.load %arg4[%c0_6, %c0_7] : memref<128x128xbf16, #tpu.memory_space<vmem>>, vector<128x128xbf16>
    %cst_8 = arith.constant dense<0.000000e+00> : vector<8x128xf32>
    %11 = tpu.matmul %9, %10, %cst_8 {dimension_numbers = #tpu.dot_dimension_numbers<[1], [0], [0], [1], [0, 0, 1, 1], [], []>} : vector<8x128xbf16>, vector<128x128xbf16>, vector<8x128xf32> -> vector<8x128xf32>
    %c0_9 = arith.constant 0 : index
    %c0_10 = arith.constant 0 : index
    %12 = vector.load %arg5[%c0_9, %c0_10] : memref<1x128xf32, #tpu.memory_space<vmem>>, vector<1x128xf32>
    %13 = vector.broadcast %12 : vector<1x128xf32> to vector<8x128xf32>
    %14 = arith.addf %11, %13 : vector<8x128xf32>
    %cst_11 = arith.constant 0.000000e+00 : f32
    %15 = vector.broadcast %cst_11 : f32 to vector<8x128xf32>
    %16 = arith.maximumf %14, %15 : vector<8x128xf32>
    %17 = arith.truncf %16 : vector<8x128xf32> to vector<8x128xbf16>
    %c0_12 = arith.constant 0 : index
    %c0_13 = arith.constant 0 : index
    %18 = vector.load %arg6[%c0_12, %c0_13] : memref<128x128xbf16, #tpu.memory_space<vmem>>, vector<128x128xbf16>
    %cst_14 = arith.constant dense<0.000000e+00> : vector<8x128xf32>
    %19 = tpu.matmul %17, %18, %cst_14 {dimension_numbers = #tpu.dot_dimension_numbers<[1], [0], [0], [1], [0, 0, 1, 1], [], []>} : vector<8x128xbf16>, vector<128x128xbf16>, vector<8x128xf32> -> vector<8x128xf32>
    %c0_15 = arith.constant 0 : index
    %c0_16 = arith.constant 0 : index
    %20 = vector.load %arg7[%c0_15, %c0_16] : memref<1x128xf32, #tpu.memory_space<vmem>>, vector<1x128xf32>
    %21 = vector.broadcast %20 : vector<1x128xf32> to vector<8x128xf32>
    %22 = arith.addf %19, %21 : vector<8x128xf32>
    %cst_17 = arith.constant dense<0xFF800000> : vector<8xf32>
    %23 = vector.multi_reduction <maximumf>, %22, %cst_17 [1] : vector<8x128xf32> to vector<8xf32>
    %24 = vector.shape_cast %23 : vector<8xf32> to vector<8x1xf32>
    %25 = vector.broadcast %24 : vector<8x1xf32> to vector<8x128xf32>
    %26 = arith.subf %22, %25 : vector<8x128xf32>
    %27 = math.exp %26 : vector<8x128xf32>
    %cst_18 = arith.constant dense<0.000000e+00> : vector<8xf32>
    %28 = vector.multi_reduction <add>, %27, %cst_18 [1] : vector<8x128xf32> to vector<8xf32>
    %29 = vector.shape_cast %28 : vector<8xf32> to vector<8x1xf32>
    %30 = math.log %29 : vector<8x1xf32>
    %31 = vector.broadcast %30 : vector<8x1xf32> to vector<8x128xf32>
    %32 = arith.subf %26, %31 : vector<8x128xf32>
    %33 = arith.truncf %32 : vector<8x128xf32> to vector<8x128xbf16>
    %c0_19 = arith.constant 0 : index
    %c0_20 = arith.constant 0 : index
    %34 = vector.load %arg8[%c0_19, %c0_20] : memref<8x128xbf16, #tpu.memory_space<vmem>>, vector<8x128xbf16>
    tpu.vector_store %arg8[%c0_19, %c0_20], %33 {strides = array<i32>} : memref<8x128xbf16, #tpu.memory_space<vmem>>, vector<8x128xbf16>,
    return
  }
  func.func @transform_0(%arg0: i32) -> (i32, i32) {
    %c0_i32 = arith.constant 0 : i32
    %c0_i32_0 = arith.constant 0 : i32
    return %arg0, %c0_i32 : i32, i32
  }
  func.func @transform_1(%arg0: i32) -> (i32, i32) {
    %c0_i32 = arith.constant 0 : i32
    %c0_i32_0 = arith.constant 0 : i32
    %c0_i32_1 = arith.constant 0 : i32
    return %c0_i32, %c0_i32_0 : i32, i32
  }
  func.func @transform_2(%arg0: i32) -> (i32, i32) {
    %c0_i32 = arith.constant 0 : i32
    %c0_i32_0 = arith.constant 0 : i32
    %c0_i32_1 = arith.constant 0 : i32
    return %c0_i32, %c0_i32_0 : i32, i32
  }
  func.func @transform_3(%arg0: i32) -> (i32, i32) {
    %c0_i32 = arith.constant 0 : i32
    %c0_i32_0 = arith.constant 0 : i32
    %c0_i32_1 = arith.constant 0 : i32
    return %c0_i32, %c0_i32_0 : i32, i32
  }
  func.func @transform_4(%arg0: i32) -> (i32, i32) {
    %c0_i32 = arith.constant 0 : i32
    %c0_i32_0 = arith.constant 0 : i32
    %c0_i32_1 = arith.constant 0 : i32
    return %c0_i32, %c0_i32_0 : i32, i32
  }
  func.func @transform_5(%arg0: i32) -> (i32, i32) {
    %c0_i32 = arith.constant 0 : i32
    %c0_i32_0 = arith.constant 0 : i32
    %c0_i32_1 = arith.constant 0 : i32
    return %c0_i32, %c0_i32_0 : i32, i32
  }
  func.func @transform_6(%arg0: i32) -> (i32, i32) {
    %c0_i32 = arith.constant 0 : i32
    %c0_i32_0 = arith.constant 0 : i32
    %c0_i32_1 = arith.constant 0 : i32
    return %c0_i32, %c0_i32_0 : i32, i32
  }
  func.func @transform_7(%arg0: i32) -> (i32, i32) {
    %c0_i32 = arith.constant 0 : i32
    %c0_i32_0 = arith.constant 0 : i32
    return %arg0, %c0_i32 : i32, i32
  }
}

</mosaic_0001>

<llo_original>
// kernel: net_arch1_forward.1
$region0: #{net_arch1_forward.1}
  #allocation0 [shape = 'u32[]', space=smem, size = 0x4, offset = 0x4, fixed_abs, tag = 'smem constant byte address 0x4 - core index']
  #allocation1 [shape = 'u32[144,128]{1,0:T(1,128)}', space=vmem, size = 0x12000, scoped, tag = 'internal scratch']
  %s0 = inlined_call_operand.hbm [shape: f32[8,100], index: 0, kind: input, shape index: {}]
  %s1 = inlined_call_operand.hbm [shape: bf16[100,128], index: 1, kind: input, shape index: {}]
  %s2 = inlined_call_operand.vmem [shape: f32[1,128], index: 2, kind: input, shape index: {}]
  %s3 = inlined_call_operand.hbm [shape: bf16[128,128], index: 3, kind: input, shape index: {}]
  %s4 = inlined_call_operand.vmem [shape: f32[1,128], index: 4, kind: input, shape index: {}]
  %s5 = inlined_call_operand.hbm [shape: bf16[128,128], index: 5, kind: input, shape index: {}]
  %s6 = inlined_call_operand.vmem [shape: f32[1,128], index: 6, kind: input, shape index: {}]
  %s7 = inlined_call_operand.vmem [shape: bf16[8,128], index: 7, kind: output, shape index: {}]
  %s8 = sld [smem:[#allocation0]]
  $region54: #{net_arch1_forward.1} parent=0
    _
  %s10 = ssub.s32 1, %s8
  %s11 = scalar_select 0, %s10, %s8
  $region1: #{net_arch1_forward.1} parent=0
    #allocation2 [shape = 'u8[4096]{0}', space=vmem, size = 0x1000, scoped, tag = 'input window, operand 0, single buffered']
    #allocation3 [shape = 's32[1]{0}', space=sflag, size = 0x4, scoped, tag = 'scoped memory for net_arch1_forward.1']
    #allocation4 [shape = 'u8[26624]{0}', space=vmem, size = 0x6800, scoped, tag = 'input window, operand 1, single buffered']
    #allocation5 [shape = 's32[1]{0}', space=sflag, size = 0x4, scoped, tag = 'scoped memory for net_arch1_forward.1']
    #allocation6 [shape = 'u8[32768]{0}', space=vmem, size = 0x8000, scoped, tag = 'input window, operand 3, single buffered']
    #allocation7 [shape = 'u8[32768]{0}', space=vmem, size = 0x8000, scoped, tag = 'input window, operand 5, single buffered']
    #allocation8 [shape = 's32[1]{0}', space=sflag, size = 0x4, scoped, tag = 'scoped memory for net_arch1_forward.1']
    %12 = vsyncpa [#allocation3], 0
    %13 = vsyncpa [#allocation5], 0
    %14 = vsyncpa [#allocation8], 0
    // Predicated region
    $region2: #{net_arch1_forward.1} parent=1 // pred_check
      _
    $region3: #{net_arch1_forward.1} parent=1 // pred_check_branch
      %16 = sbr.rel (0) target = $region5
    $region4: #{net_arch1_forward.1} parent=1 // pred_region
      %s18 = ssub.s32 128, 128
      %19 = vsyncadd [#allocation3], %s18
      %s21 = sshll.u32 [#allocation2], 4
      %s22 = int_to_ptr.vmem [resolvable:$true] %s21
      %24 = dma.hbm_to_vmem [thread:$0]  %s0, 128, %s22, [#allocation3]
    $region5: #{net_arch1_forward.1} parent=1 // pred_fallthru
      _
    // Predicated region
    $region6: #{net_arch1_forward.1} parent=1 // pred_check
      _
    $region7: #{net_arch1_forward.1} parent=1 // pred_check_branch
      %26 = sbr.rel (0) target = $region9
    $region8: #{net_arch1_forward.1} parent=1 // pred_region
      %s28 = ssub.s32 832, 832
      %29 = vsyncadd [#allocation5], %s28
      %s30 = sshll.u32 [#allocation4], 4
      %s31 = int_to_ptr.vmem [resolvable:$true] %s30
      %36 = dma.hbm_to_vmem [thread:$0]  %s1, 832, %s31, [#allocation5], 64, 64, 4
    $region9: #{net_arch1_forward.1} parent=1 // pred_fallthru
      _
    // Predicated region
    $region10: #{net_arch1_forward.1} parent=1 // pred_check
      _
    $region11: #{net_arch1_forward.1} parent=1 // pred_check_branch
      %38 = sbr.rel (0) target = $region13
    $region12: #{net_arch1_forward.1} parent=1 // pred_region
      _
    $region13: #{net_arch1_forward.1} parent=1 // pred_fallthru
      _
    // Predicated region
    $region14: #{net_arch1_forward.1} parent=1 // pred_check
      _
    $region15: #{net_arch1_forward.1} parent=1 // pred_check_branch
      %40 = sbr.rel (0) target = $region17
    $region16: #{net_arch1_forward.1} parent=1 // pred_region
      %s42 = ssub.s32 1024, 1024
      %43 = vsyncadd [#allocation5], %s42
      %s44 = sshll.u32 [#allocation6], 4
      %s45 = int_to_ptr.vmem [resolvable:$true] %s44
      %50 = dma.hbm_to_vmem [thread:$0]  %s3, 1024, %s45, [#allocation5], 64, 64, 4
    $region17: #{net_arch1_forward.1} parent=1 // pred_fallthru
      _
    // Predicated region
    $region18: #{net_arch1_forward.1} parent=1 // pred_check
      _
    $region19: #{net_arch1_forward.1} parent=1 // pred_check_branch
      %52 = sbr.rel (0) target = $region21
    $region20: #{net_arch1_forward.1} parent=1 // pred_region
      _
    $region21: #{net_arch1_forward.1} parent=1 // pred_fallthru
      _
    // Predicated region
    $region22: #{net_arch1_forward.1} parent=1 // pred_check
      _
    $region23: #{net_arch1_forward.1} parent=1 // pred_check_branch
      %54 = sbr.rel (0) target = $region25
    $region24: #{net_arch1_forward.1} parent=1 // pred_region
      %s56 = ssub.s32 1024, 1024
      %57 = vsyncadd [#allocation8], %s56
      %s58 = sshll.u32 [#allocation7], 4
      %s59 = int_to_ptr.vmem [resolvable:$true] %s58
      %64 = dma.hbm_to_vmem [thread:$0]  %s5, 1024, %s59, [#allocation8], 64, 64, 4
    $region25: #{net_arch1_forward.1} parent=1 // pred_fallthru
      _
    // Predicated region
    $region26: #{net_arch1_forward.1} parent=1 // pred_check
      _
    $region27: #{net_arch1_forward.1} parent=1 // pred_check_branch
      %66 = sbr.rel (0) target = $region29
    $region28: #{net_arch1_forward.1} parent=1 // pred_region
      _
    $region29: #{net_arch1_forward.1} parent=1 // pred_fallthru
      _
    // Predicated region
    $region30: #{net_arch1_forward.1} parent=1 // pred_check
      _
    $region31: #{net_arch1_forward.1} parent=1 // pred_check_branch
      %68 = sbr.rel (0) target = $region33
    $region32: #{net_arch1_forward.1} parent=1 // pred_region
      %69 = dma.done [#allocation3], 128
    $region33: #{net_arch1_forward.1} parent=1 // pred_fallthru
      _
    // Predicated region
    $region34: #{net_arch1_forward.1} parent=1 // pred_check
      _
    $region35: #{net_arch1_forward.1} parent=1 // pred_check_branch
      %71 = sbr.rel (0) target = $region37
    $region36: #{net_arch1_forward.1} parent=1 // pred_region
      %72 = dma.done [#allocation5], 832
    $region37: #{net_arch1_forward.1} parent=1 // pred_fallthru
      _
    // Predicated region
    $region38: #{net_arch1_forward.1} parent=1 // pred_check
      _
    $region39: #{net_arch1_forward.1} parent=1 // pred_check_branch
      %74 = sbr.rel (0) target = $region41
    $region40: #{net_arch1_forward.1} parent=1 // pred_region
      %75 = dma.done [#allocation5], 1024
    $region41: #{net_arch1_forward.1} parent=1 // pred_fallthru
      _
    // Predicated region
    $region42: #{net_arch1_forward.1} parent=1 // pred_check
      _
    $region43: #{net_arch1_forward.1} parent=1 // pred_check_branch
      %77 = sbr.rel (0) target = $region45
    $region44: #{net_arch1_forward.1} parent=1 // pred_region
      %78 = dma.done [#allocation8], 1024
    $region45: #{net_arch1_forward.1} parent=1 // pred_fallthru
      _
    %v80 = vld [vmem:[#allocation2] sm:$0xff]
    %v81 = vpack.c.bf16 %v80, %v80
    %v82 = vld [vmem:[#allocation4] sm:$0xf]
    %v83 = vld [vmem:[#allocation4 + $0x4] sm:$0xf]
    %v84 = vld [vmem:[#allocation4 + $0x8] sm:$0xf]
    %v85 = vld [vmem:[#allocation4 + $0xc] sm:$0xf]
    %v86 = vld [vmem:[#allocation4 + $0x10] sm:$0xf]
    %v87 = vld [vmem:[#allocation4 + $0x14] sm:$0xf]
    %v88 = vld [vmem:[#allocation4 + $0x18] sm:$0xf]
    %v89 = vld [vmem:[#allocation4 + $0x1c] sm:$0xf]
    %v90 = vld [vmem:[#allocation4 + $0x20] sm:$0xf]
    %v91 = vld [vmem:[#allocation4 + $0x24] sm:$0xf]
    %v92 = vld [vmem:[#allocation4 + $0x28] sm:$0xf]
    %v93 = vld [vmem:[#allocation4 + $0x2c] sm:$0xf]
    %v94 = vld [vmem:[#allocation4 + $0x30] sm:$0x3]
    %v95 = vld [vmem:[%s2] sm:$0x1]
    %v97 = vlaneseq
    %v98 = vshrl.u32 %v97, 7
    %v99 = vsub.s32 0, %v98
    %v100 = vrot.slane %v95, %v99
    %v115 = vunpack.c.l.b16 %v82
    %v116 = vunpack.c.l.b16 %v83
    %v117 = vunpack.c.l.b16 %v84
    %v118 = vunpack.c.l.b16 %v85
    %v119 = vunpack.c.l.b16 %v86
    %v120 = vunpack.c.l.b16 %v87
    %v121 = vunpack.c.l.b16 %v88
    %v122 = vunpack.c.l.b16 %v89
    %v123 = vunpack.c.l.b16 %v90
    %v124 = vunpack.c.l.b16 %v91
    %v125 = vunpack.c.l.b16 %v92
    %v126 = vunpack.c.l.b16 %v93
    %v127 = vunpack.c.l.b16 %v94
    %v128 = vpack.c.b16 %v116, %v115
    %v129 = vpack.c.b16 %v118, %v117
    %v130 = vpack.c.b16 %v120, %v119
    %v131 = vpack.c.b16 %v122, %v121
    %v132 = vpack.c.b16 %v124, %v123
    %v133 = vpack.c.b16 %v126, %v125
    %v134 = vpack.c.b16 %v127, %v127
    %vm141 = vcmask 818176
    %v143 = vsel %vm141, %v81, 0
    %vm145 = vcmask 1041408
    %v147 = vsel %vm145, %v134, 0
    %149 = vmatprep.subr.bf16.mxu0 0
    %150 = vmatpush1.bf16.msra.mxu0 %v128
    %151 = vmatprep.subr.bf16.mxu0 0
    %152 = vmatpush1.bf16.msra.mxu0 %v129
    %153 = vmatprep.subr.bf16.mxu0 0
    %154 = vmatpush1.bf16.msra.mxu0 %v130
    %155 = vmatprep.subr.bf16.mxu0 0
    %156 = vmatpush1.bf16.msra.mxu0 %v131
    %157 = vmatprep.subr.bf16.mxu0 0
    %158 = vmatpush1.bf16.msra.mxu0 %v132
    %159 = vmatprep.subr.bf16.mxu0 0
    %160 = vmatpush1.bf16.msra.mxu0 %v133
    %161 = vmatprep.subr.bf16.mxu0 0
    %162 = vmatpush1.bf16.msra.mxu0 %v147
    %163 = vmatprep.subr.bf16.mxu0 0
    %164 = vmatpush1.bf16.msra.mxu0 0
    %165 = vmatprep.subr.bf16.mxu0 0
    %166 = vmatpush1.bf16.msra.mxu0 0
    %167 = vmatprep.subr.bf16.mxu0 0
    %168 = vmatpush1.bf16.msra.mxu0 0
    %169 = vmatprep.subr.bf16.mxu0 0
    %170 = vmatpush1.bf16.msra.mxu0 0
    %171 = vmatprep.subr.bf16.mxu0 0
    %172 = vmatpush1.bf16.msra.mxu0 0
    %173 = vmatprep.subr.bf16.mxu0 0
    %174 = vmatpush1.bf16.msra.mxu0 0
    %175 = vmatprep.subr.bf16.mxu0 0
    %176 = vmatpush1.bf16.msra.mxu0 0
    %177 = vmatprep.subr.bf16.mxu0 0
    %178 = vmatpush1.bf16.msra.mxu0 0
    %179 = vmatprep.subr.bf16.mxu0 0
    %180 = vmatpush1.bf16.msra.mxu0 0
    %181 = vmatprep.mubr.bf16.mxu0 0
    %182 = vmatmul.mubr.bf16.gmra.mrb[0].mxu0 %v143
    %v183 = vpop.f32.mrb[0].mxu0
    %v184 = vadd.f32 %v100, %v183
    %v185 = vpop.f32.mrb[0].mxu0
    %v186 = vpop.f32.mrb[0].mxu0
    %v187 = vpop.f32.mrb[0].mxu0
    %188 = vdwg.mxu0
    %v189 = vmax.f32 %v184, 0.0
    %v190 = vpack.c.bf16 %v189, %v189
    %v191 = vld [vmem:[#allocation6] sm:$0xf]
    %v192 = vld [vmem:[#allocation6 + $0x4] sm:$0xf]
    %v193 = vld [vmem:[#allocation6 + $0x8] sm:$0xf]
    %v194 = vld [vmem:[#allocation6 + $0xc] sm:$0xf]
    %v195 = vld [vmem:[#allocation6 + $0x10] sm:$0xf]
    %v196 = vld [vmem:[#allocation6 + $0x14] sm:$0xf]
    %v197 = vld [vmem:[#allocation6 + $0x18] sm:$0xf]
    %v198 = vld [vmem:[#allocation6 + $0x1c] sm:$0xf]
    %v199 = vld [vmem:[#allocation6 + $0x20] sm:$0xf]
    %v200 = vld [vmem:[#allocation6 + $0x24] sm:$0xf]
    %v201 = vld [vmem:[#allocation6 + $0x28] sm:$0xf]
    %v202 = vld [vmem:[#allocation6 + $0x2c] sm:$0xf]
    %v203 = vld [vmem:[#allocation6 + $0x30] sm:$0xf]
    %v204 = vld [vmem:[#allocation6 + $0x34] sm:$0xf]
    %v205 = vld [vmem:[#allocation6 + $0x38] sm:$0xf]
    %v206 = vld [vmem:[#allocation6 + $0x3c] sm:$0xf]
    %v207 = vld [vmem:[%s4] sm:$0x1]
    %v209 = vlaneseq
    %v210 = vshrl.u32 %v209, 7
    %v211 = vsub.s32 0, %v210
    %v212 = vrot.slane %v207, %v211
    %v230 = vunpack.c.l.b16 %v191
    %v231 = vunpack.c.l.b16 %v192
    %v232 = vunpack.c.l.b16 %v193
    %v233 = vunpack.c.l.b16 %v194
    %v234 = vunpack.c.l.b16 %v195
    %v235 = vunpack.c.l.b16 %v196
    %v236 = vunpack.c.l.b16 %v197
    %v237 = vunpack.c.l.b16 %v198
    %v238 = vunpack.c.l.b16 %v199
    %v239 = vunpack.c.l.b16 %v200
    %v240 = vunpack.c.l.b16 %v201
    %v241 = vunpack.c.l.b16 %v202
    %v242 = vunpack.c.l.b16 %v203
    %v243 = vunpack.c.l.b16 %v204
    %v244 = vunpack.c.l.b16 %v205
    %v245 = vunpack.c.l.b16 %v206
    %v246 = vpack.c.b16 %v231, %v230
    %v247 = vpack.c.b16 %v233, %v232
    %v248 = vpack.c.b16 %v235, %v234
    %v249 = vpack.c.b16 %v237, %v236
    %v250 = vpack.c.b16 %v239, %v238
    %v251 = vpack.c.b16 %v241, %v240
    %v252 = vpack.c.b16 %v243, %v242
    %v253 = vpack.c.b16 %v245, %v244
    %262 = vmatprep.subr.bf16.mxu0 0
    %263 = vmatpush1.bf16.msra.mxu0 %v246
    %264 = vmatprep.subr.bf16.mxu0 0
    %265 = vmatpush1.bf16.msra.mxu0 %v247
    %266 = vmatprep.subr.bf16.mxu0 0
    %267 = vmatpush1.bf16.msra.mxu0 %v248
    %268 = vmatprep.subr.bf16.mxu0 0
    %269 = vmatpush1.bf16.msra.mxu0 %v249
    %270 = vmatprep.subr.bf16.mxu0 0
    %271 = vmatpush1.bf16.msra.mxu0 %v250
    %272 = vmatprep.subr.bf16.mxu0 0
    %273 = vmatpush1.bf16.msra.mxu0 %v251
    %274 = vmatprep.subr.bf16.mxu0 0
    %275 = vmatpush1.bf16.msra.mxu0 %v252
    %276 = vmatprep.subr.bf16.mxu0 0
    %277 = vmatpush1.bf16.msra.mxu0 %v253
    %278 = vmatprep.subr.bf16.mxu0 0
    %279 = vmatpush1.bf16.msra.mxu0 0
    %280 = vmatprep.subr.bf16.mxu0 0
    %281 = vmatpush1.bf16.msra.mxu0 0
    %282 = vmatprep.subr.bf16.mxu0 0
    %283 = vmatpush1.bf16.msra.mxu0 0
    %284 = vmatprep.subr.bf16.mxu0 0
    %285 = vmatpush1.bf16.msra.mxu0 0
    %286 = vmatprep.subr.bf16.mxu0 0
    %287 = vmatpush1.bf16.msra.mxu0 0
    %288 = vmatprep.subr.bf16.mxu0 0
    %289 = vmatpush1.bf16.msra.mxu0 0
    %290 = vmatprep.subr.bf16.mxu0 0
    %291 = vmatpush1.bf16.msra.mxu0 0
    %292 = vmatprep.subr.bf16.mxu0 0
    %293 = vmatpush1.bf16.msra.mxu0 0
    %294 = vmatprep.mubr.bf16.mxu0 0
    %295 = vmatmul.mubr.bf16.gmra.mrb[0].mxu0 %v190
    %v296 = vpop.f32.mrb[0].mxu0
    %v297 = vadd.f32 %v212, %v296
    %v298 = vpop.f32.mrb[0].mxu0
    %v299 = vpop.f32.mrb[0].mxu0
    %v300 = vpop.f32.mrb[0].mxu0
    %301 = vdwg.mxu0
    %v302 = vmax.f32 %v297, 0.0
    %v303 = vpack.c.bf16 %v302, %v302
    %v304 = vld [vmem:[#allocation7] sm:$0xf]
    %v305 = vld [vmem:[#allocation7 + $0x4] sm:$0xf]
    %v306 = vld [vmem:[#allocation7 + $0x8] sm:$0xf]
    %v307 = vld [vmem:[#allocation7 + $0xc] sm:$0xf]
    %v308 = vld [vmem:[#allocation7 + $0x10] sm:$0xf]
    %v309 = vld [vmem:[#allocation7 + $0x14] sm:$0xf]
    %v310 = vld [vmem:[#allocation7 + $0x18] sm:$0xf]
    %v311 = vld [vmem:[#allocation7 + $0x1c] sm:$0xf]
    %v312 = vld [vmem:[#allocation7 + $0x20] sm:$0xf]
    %v313 = vld [vmem:[#allocation7 + $0x24] sm:$0xf]
    %v314 = vld [vmem:[#allocation7 + $0x28] sm:$0xf]
    %v315 = vld [vmem:[#allocation7 + $0x2c] sm:$0xf]
    %v316 = vld [vmem:[#allocation7 + $0x30] sm:$0xf]
    %v317 = vld [vmem:[#allocation7 + $0x34] sm:$0xf]
    %v318 = vld [vmem:[#allocation7 + $0x38] sm:$0xf]
    %v319 = vld [vmem:[#allocation7 + $0x3c] sm:$0xf]
    %v320 = vld [vmem:[%s6] sm:$0x1]
    %v322 = vlaneseq
    %v323 = vshrl.u32 %v322, 7
    %v324 = vsub.s32 0, %v323
    %v325 = vrot.slane %v320, %v324
    %v343 = vunpack.c.l.b16 %v304
    %v344 = vunpack.c.l.b16 %v305
    %v345 = vunpack.c.l.b16 %v306
    %v346 = vunpack.c.l.b16 %v307
    %v347 = vunpack.c.l.b16 %v308
    %v348 = vunpack.c.l.b16 %v309
    %v349 = vunpack.c.l.b16 %v310
    %v350 = vunpack.c.l.b16 %v311
    %v351 = vunpack.c.l.b16 %v312
    %v352 = vunpack.c.l.b16 %v313
    %v353 = vunpack.c.l.b16 %v314
    %v354 = vunpack.c.l.b16 %v315
    %v355 = vunpack.c.l.b16 %v316
    %v356 = vunpack.c.l.b16 %v317
    %v357 = vunpack.c.l.b16 %v318
    %v358 = vunpack.c.l.b16 %v319
    %v359 = vpack.c.b16 %v344, %v343
    %v360 = vpack.c.b16 %v346, %v345
    %v361 = vpack.c.b16 %v348, %v347
    %v362 = vpack.c.b16 %v350, %v349
    %v363 = vpack.c.b16 %v352, %v351
    %v364 = vpack.c.b16 %v354, %v353
    %v365 = vpack.c.b16 %v356, %v355
    %v366 = vpack.c.b16 %v358, %v357
    %375 = vmatprep.subr.bf16.mxu0 0
    %376 = vmatpush1.bf16.msra.mxu0 %v359
    %377 = vmatprep.subr.bf16.mxu0 0
    %378 = vmatpush1.bf16.msra.mxu0 %v360
    %379 = vmatprep.subr.bf16.mxu0 0
    %380 = vmatpush1.bf16.msra.mxu0 %v361
    %381 = vmatprep.subr.bf16.mxu0 0
    %382 = vmatpush1.bf16.msra.mxu0 %v362
    %383 = vmatprep.subr.bf16.mxu0 0
    %384 = vmatpush1.bf16.msra.mxu0 %v363
    %385 = vmatprep.subr.bf16.mxu0 0
    %386 = vmatpush1.bf16.msra.mxu0 %v364
    %387 = vmatprep.subr.bf16.mxu0 0
    %388 = vmatpush1.bf16.msra.mxu0 %v365
    %389 = vmatprep.subr.bf16.mxu0 0
    %390 = vmatpush1.bf16.msra.mxu0 %v366
    %391 = vmatprep.subr.bf16.mxu0 0
    %392 = vmatpush1.bf16.msra.mxu0 0
    %393 = vmatprep.subr.bf16.mxu0 0
    %394 = vmatpush1.bf16.msra.mxu0 0
    %395 = vmatprep.subr.bf16.mxu0 0
    %396 = vmatpush1.bf16.msra.mxu0 0
    %397 = vmatprep.subr.bf16.mxu0 0
    %398 = vmatpush1.bf16.msra.mxu0 0
    %399 = vmatprep.subr.bf16.mxu0 0
    %400 = vmatpush1.bf16.msra.mxu0 0
    %401 = vmatprep.subr.bf16.mxu0 0
    %402 = vmatpush1.bf16.msra.mxu0 0
    %403 = vmatprep.subr.bf16.mxu0 0
    %404 = vmatpush1.bf16.msra.mxu0 0
    %405 = vmatprep.subr.bf16.mxu0 0
    %406 = vmatpush1.bf16.msra.mxu0 0
    %407 = vmatprep.mubr.bf16.mxu0 0
    %408 = vmatmul.mubr.bf16.gmra.mrb[0].mxu0 %v303
    %v409 = vpop.f32.mrb[0].mxu0
    %v410 = vadd.f32 %v325, %v409
    %v411 = vpop.f32.mrb[0].mxu0
    %v412 = vpop.f32.mrb[0].mxu0
    %v413 = vpop.f32.mrb[0].mxu0
    %414 = vdwg.mxu0
    %415 = vmax.xlane.f32.xlu0 %v410
    %v416 = vpop.xlane.xlu0 %415
    %v417 = vsub.f32 %v410, %v416
    %v418 = vmul.f32 %v417, 1.442695
    %v419 = vpow.pop %v418
    %420 = vadd.xlane.f32.xlu0 %v419
    %v421 = vpop.xlane.xlu0 %420
    %v422 = vlog2.pop %v421
    %v423 = vmul.f32 %v422, 0.6931472
    %v424 = vsub.f32 %v417, %v423
    %v425 = vpack.c.bf16 %v424, %v424
    %426 = vst [vmem:[%s7] sm:$0xf] %v425
    // Predicated region
    $region46: #{net_arch1_forward.1} parent=1 // pred_check
      _
    $region47: #{net_arch1_forward.1} parent=1 // pred_check_branch
      %428 = sbr.rel (0) target = $region49
    $region48: #{net_arch1_forward.1} parent=1 // pred_region
      _
    $region49: #{net_arch1_forward.1} parent=1 // pred_fallthru
      _
    // Predicated region
    $region50: #{net_arch1_forward.1} parent=1 // pred_check
      _
    $region51: #{net_arch1_forward.1} parent=1 // pred_check_branch
      %430 = sbr.rel (0) target = $region53
    $region52: #{net_arch1_forward.1} parent=1 // pred_region
      _
    $region53: #{net_arch1_forward.1} parent=1 // pred_fallthru
      _
    %431 = vsyncpa [#allocation3], 1
    %432 = vsyncpa [#allocation5], 1
    %433 = vsyncpa [#allocation8], 1

</llo_original>
